<compile_context>
chip_gen: v6e
topology: v6e:2x2x1
jax: 0.10.0
libtpu: 0.0.40
codegen_flags: <defaults>
</compile_context>

<pallas_src>
import jax
import jax.numpy as jnp
from jax.experimental import pallas as pl
from jax.experimental.pallas import tpu as pltpu


def _round_up(x, n):
    return ((x + n - 1) // n) * n


def mlp_kernel(x_ref, w1_ref, b1_ref, w2_ref, b2_ref, o_ref):
    # Cast to the compute dtype inside the kernel (no extra HBM pass).
    x = x_ref[...].astype(w1_ref.dtype)
    # hidden = relu(x @ W1 + b1), f32 accumulation on the MXU.
    h = jnp.dot(x, w1_ref[...], preferred_element_type=jnp.float32)
    h = jnp.maximum(h + b1_ref[...], 0.0).astype(w2_ref.dtype)  # (TM, mid_p)
    # out = hidden @ W2 + b2, f32 accumulation.
    o = jnp.dot(h, w2_ref[...], preferred_element_type=jnp.float32)
    o_ref[...] = (o + b2_ref[...]).astype(o_ref.dtype)


def mlp_pallas(x, w1, b1, w2, b2, *, tile_m=1024, compute_dtype=None):
    """x: (..., in_channels) -> (..., out_channels), same as the torch MLP.

    compute_dtype: dtype fed to the MXU (e.g. jnp.bfloat16 on v6e/v7x).
    Accumulation is always f32; output dtype matches x.
    """
    in_ch = x.shape[-1]
    mid_ch = w1.shape[1]
    out_ch = w2.shape[1]
    lead_shape = x.shape[:-1]
    out_dtype = x.dtype
    cdt = jnp.dtype(compute_dtype) if compute_dtype is not None else jnp.dtype(x.dtype)

    x2d = x.reshape(-1, in_ch)          # metadata-only reshape
    m = x2d.shape[0]

    # --- weights/biases: pad only the hidden dim to 128 lanes ---------------
    LANE = 128
    mid_p = _round_up(mid_ch, LANE)
    if mid_p == mid_ch:
        w1_p = w1.astype(cdt)
        w2_p = w2.astype(cdt)
        b1_p = b1.astype(jnp.float32).reshape(1, mid_ch)
    else:
        w1_p = jnp.zeros((in_ch, mid_p), cdt).at[:, :mid_ch].set(w1.astype(cdt))
        w2_p = jnp.zeros((mid_p, out_ch), cdt).at[:mid_ch, :].set(w2.astype(cdt))
        b1_p = jnp.zeros((1, mid_p), jnp.float32).at[0, :mid_ch].set(
            b1.astype(jnp.float32))
    b2_p = b2.astype(jnp.float32).reshape(1, out_ch)

    # --- row tiling ----------------------------------------------------------
    tile = max(8, _round_up(tile_m, 8))
    if m <= tile:
        tile = m                        # single full-extent block (always legal)
    else:
        # Keep >=4 steps when rows permit: pipeline overlap + v7x's 2 TCs each
        # get >=2 steps.  Overhead on single-TC v5e/v6e is ~1 us total.
        while pl.cdiv(m, tile) < 4 and tile > 256:
            tile = _round_up(tile // 2, 8)
    grid_m = pl.cdiv(m, tile)

    # --- VMEM budget (double-buffered x/out tiles + resident weights) -------
    csz = cdt.itemsize
    xsz = jnp.dtype(x.dtype).itemsize
    osz = jnp.dtype(out_dtype).itemsize
    vmem_est = (2 * tile * in_ch * xsz                      # x tile (double buffered)
                + 2 * tile * out_ch * osz                   # out tile (double buffered)
                + 2 * (in_ch * mid_p + mid_p * out_ch) * csz  # weights (pipeline bufs)
                + 2 * (mid_p + out_ch) * 4                  # biases
                + tile * mid_p * 4                          # f32 hidden accumulator
                + tile * mid_p * csz)                       # hidden in compute dtype
    try:
        vmem_cap = pltpu.get_tpu_info().vmem_capacity_bytes
    except Exception:
        vmem_cap = 64 * 1024 * 1024     # conservative: v7x physical VMEM
    vmem_limit = int(min(max(2 * vmem_est, 16 * 1024 * 1024),
                         int(vmem_cap * 0.75)))

    # TODO(synk): mark weight/bias BlockSpecs single-buffered
    # (pipeline_mode=pl.Buffered(1)) to halve their VMEM footprint for
    # large-mid FNO configs on v7x; and add a grid axis over mid with a VMEM
    # accumulator once tile*mid no longer fits.
    out2d = pl.pallas_call(
        mlp_kernel,
        out_shape=jax.ShapeDtypeStruct((m, out_ch), out_dtype),
        grid_spec=pltpu.PrefetchScalarGridSpec(
            num_scalar_prefetch=0,
            grid=(grid_m,),
            in_specs=[
                pl.BlockSpec((tile, in_ch), lambda i: (i, 0)),
                pl.BlockSpec((in_ch, mid_p), lambda i: (0, 0)),
                pl.BlockSpec((1, mid_p), lambda i: (0, 0)),
                pl.BlockSpec((mid_p, out_ch), lambda i: (0, 0)),
                pl.BlockSpec((1, out_ch), lambda i: (0, 0)),
            ],
            out_specs=pl.BlockSpec((tile, out_ch), lambda i: (i, 0)),
        ),
        compiler_params=pltpu.CompilerParams(
            dimension_semantics=("parallel",),
            vmem_limit_bytes=vmem_limit,
        ),
    )(x2d, w1_p, b1_p, w2_p, b2_p)

    return out2d.reshape(*lead_shape, out_ch)


def mlp_reference(x, w1, b1, w2, b2):
    h = jnp.maximum(x @ w1 + b1, 0.0)
    return h @ w2 + b2


if __name__ == "__main__":
    # Small shapes consistent with MLP(in_channels, out_channels, mid_channels).
    batch, seq = 2, 8
    in_ch, mid_ch, out_ch = 16, 32, 16

    key = jax.random.PRNGKey(0)
    kx, kw1, kb1, kw2, kb2 = jax.random.split(key, 5)

    x = jax.random.normal(kx, (batch, seq, in_ch), dtype=jnp.float32)

    # Deterministic parameter init (uniform, like torch.nn.Linear's default scale).
    bound1 = 1.0 / (in_ch ** 0.5)
    bound2 = 1.0 / (mid_ch ** 0.5)
    w1 = jax.random.uniform(kw1, (in_ch, mid_ch), jnp.float32, -bound1, bound1)
    b1 = jax.random.uniform(kb1, (mid_ch,), jnp.float32, -bound1, bound1)
    w2 = jax.random.uniform(kw2, (mid_ch, out_ch), jnp.float32, -bound2, bound2)
    b2 = jax.random.uniform(kb2, (out_ch,), jnp.float32, -bound2, bound2)

    # f32 path (exact vs reference).
    out = mlp_pallas(x, w1, b1, w2, b2)
    out = jax.block_until_ready(out)
    ref = mlp_reference(x, w1, b1, w2, b2)
    assert out.shape == (batch, seq, out_ch)
    assert jnp.allclose(out, ref, atol=1e-5, rtol=1e-5)

    # Uneven row count (M=21) exercises the pl.cdiv grid / partial last block.
    x_odd = jax.random.normal(kx, (3, 7, in_ch), dtype=jnp.float32)
    out_odd = jax.block_until_ready(mlp_pallas(x_odd, w1, b1, w2, b2))
    assert jnp.allclose(out_odd, mlp_reference(x_odd, w1, b1, w2, b2),
                        atol=1e-5, rtol=1e-5)

    # Larger row count exercises multi-step grid + partial tail block.
    x_big = jax.random.normal(kx, (5, 411, in_ch), dtype=jnp.float32)
    out_big = jax.block_until_ready(mlp_pallas(x_big, w1, b1, w2, b2, tile_m=512))
    assert jnp.allclose(out_big, mlp_reference(x_big, w1, b1, w2, b2),
                        atol=1e-4, rtol=1e-4)

    # bf16-in / f32-acc fast path (v6e/v7x MXU); looser tolerance.
    out_bf16 = jax.block_until_ready(
        mlp_pallas(x, w1, b1, w2, b2, compute_dtype=jnp.bfloat16))
    assert jnp.allclose(out_bf16, ref, atol=5e-2, rtol=5e-2)

    print("KERNEL_OK")
</pallas_src>

<mosaic_0001>
module attributes {stable_mosaic.version = 11 : i64} {
  func.func @mlp_kernel(%arg0: i32, %arg1: memref<16x16xf32, #tpu.memory_space<vmem>>, %arg2: memref<16x128xf32, #tpu.memory_space<vmem>>, %arg3: memref<1x128xf32, #tpu.memory_space<vmem>>, %arg4: memref<128x16xf32, #tpu.memory_space<vmem>>, %arg5: memref<1x16xf32, #tpu.memory_space<vmem>>, %arg6: memref<16x16xf32, #tpu.memory_space<vmem>>) attributes {dimension_semantics = [#tpu.dimension_semantics<parallel>], iteration_bounds = array<i64: 1>, scalar_prefetch = 0 : i64, scratch_operands = 0 : i64, tpu.core_type = #tpu.core_type<tc>, window_params = [{transform_indices = @transform_0, window_bounds = array<i64: 16, 16>}, {pipeline_mode = #tpu.pipeline_mode<synchronous>, transform_indices = @transform_1, window_bounds = array<i64: 16, 128>}, {pipeline_mode = #tpu.pipeline_mode<synchronous>, transform_indices = @transform_2, window_bounds = array<i64: 1, 128>}, {pipeline_mode = #tpu.pipeline_mode<synchronous>, transform_indices = @transform_3, window_bounds = array<i64: 128, 16>}, {pipeline_mode = #tpu.pipeline_mode<synchronous>, transform_indices = @transform_4, window_bounds = array<i64: 1, 16>}, {transform_indices = @transform_5, window_bounds = array<i64: 16, 16>}]} {
    %c0 = arith.constant 0 : index
    %c0_0 = arith.constant 0 : index
    %0 = vector.load %arg1[%c0, %c0_0] : memref<16x16xf32, #tpu.memory_space<vmem>>, vector<16x16xf32>
    %c0_1 = arith.constant 0 : index
    %c0_2 = arith.constant 0 : index
    %1 = vector.load %arg2[%c0_1, %c0_2] : memref<16x128xf32, #tpu.memory_space<vmem>>, vector<16x128xf32>
    %cst = arith.constant dense<0.000000e+00> : vector<16x128xf32>
    %2 = tpu.matmul %0, %1, %cst {dimension_numbers = #tpu.dot_dimension_numbers<[1], [0], [0], [1], [0, 0, 1, 1], [], []>} : vector<16x16xf32>, vector<16x128xf32>, vector<16x128xf32> -> vector<16x128xf32>
    %c0_3 = arith.constant 0 : index
    %c0_4 = arith.constant 0 : index
    %3 = vector.load %arg3[%c0_3, %c0_4] : memref<1x128xf32, #tpu.memory_space<vmem>>, vector<1x128xf32>
    %4 = vector.broadcast %3 : vector<1x128xf32> to vector<16x128xf32>
    %5 = arith.addf %2, %4 : vector<16x128xf32>
    %cst_5 = arith.constant 0.000000e+00 : f32
    %6 = vector.broadcast %cst_5 : f32 to vector<16x128xf32>
    %7 = arith.maximumf %5, %6 : vector<16x128xf32>
    %c0_6 = arith.constant 0 : index
    %c0_7 = arith.constant 0 : index
    %8 = vector.load %arg4[%c0_6, %c0_7] : memref<128x16xf32, #tpu.memory_space<vmem>>, vector<128x16xf32>
    %cst_8 = arith.constant dense<0.000000e+00> : vector<16x16xf32>
    %9 = tpu.matmul %7, %8, %cst_8 {dimension_numbers = #tpu.dot_dimension_numbers<[1], [0], [0], [1], [0, 0, 1, 1], [], []>} : vector<16x128xf32>, vector<128x16xf32>, vector<16x16xf32> -> vector<16x16xf32>
    %c0_9 = arith.constant 0 : index
    %c0_10 = arith.constant 0 : index
    %10 = vector.load %arg5[%c0_9, %c0_10] : memref<1x16xf32, #tpu.memory_space<vmem>>, vector<1x16xf32>
    %11 = vector.broadcast %10 : vector<1x16xf32> to vector<16x16xf32>
    %12 = arith.addf %9, %11 : vector<16x16xf32>
    %c0_11 = arith.constant 0 : index
    %c0_12 = arith.constant 0 : index
    %13 = vector.load %arg6[%c0_11, %c0_12] : memref<16x16xf32, #tpu.memory_space<vmem>>, vector<16x16xf32>
    tpu.vector_store %arg6[%c0_11, %c0_12], %12 {strides = array<i32>} : memref<16x16xf32, #tpu.memory_space<vmem>>, vector<16x16xf32>,
    return
  }
  func.func @transform_0(%arg0: i32) -> (i32, i32) {
    %c0_i32 = arith.constant 0 : i32
    %c0_i32_0 = arith.constant 0 : i32
    return %arg0, %c0_i32 : i32, i32
  }
  func.func @transform_1(%arg0: i32) -> (i32, i32) {
    %c0_i32 = arith.constant 0 : i32
    %c0_i32_0 = arith.constant 0 : i32
    %c0_i32_1 = arith.constant 0 : i32
    return %c0_i32, %c0_i32_0 : i32, i32
  }
  func.func @transform_2(%arg0: i32) -> (i32, i32) {
    %c0_i32 = arith.constant 0 : i32
    %c0_i32_0 = arith.constant 0 : i32
    %c0_i32_1 = arith.constant 0 : i32
    return %c0_i32, %c0_i32_0 : i32, i32
  }
  func.func @transform_3(%arg0: i32) -> (i32, i32) {
    %c0_i32 = arith.constant 0 : i32
    %c0_i32_0 = arith.constant 0 : i32
    %c0_i32_1 = arith.constant 0 : i32
    return %c0_i32, %c0_i32_0 : i32, i32
  }
  func.func @transform_4(%arg0: i32) -> (i32, i32) {
    %c0_i32 = arith.constant 0 : i32
    %c0_i32_0 = arith.constant 0 : i32
    %c0_i32_1 = arith.constant 0 : i32
    return %c0_i32, %c0_i32_0 : i32, i32
  }
  func.func @transform_5(%arg0: i32) -> (i32, i32) {
    %c0_i32 = arith.constant 0 : i32
    %c0_i32_0 = arith.constant 0 : i32
    return %arg0, %c0_i32 : i32, i32
  }
}

</mosaic_0001>

<llo_original>
// kernel: tpu_custom_call.1
$region0: #{tpu_custom_call.1}
  #allocation0 [shape = 'u32[]', space=smem, size = 0x4, offset = 0x4, fixed_abs, tag = 'smem constant byte address 0x4 - core index']
  #allocation1 [shape = 'u32[144,128]{1,0:T(1,128)}', space=vmem, size = 0x12000, scoped, tag = 'internal scratch']
  %s0 = inlined_call_operand.vmem [shape: f32[16,16], index: 0, kind: input, shape index: {}]
  %s1 = inlined_call_operand.vmem [shape: f32[16,128], index: 1, kind: input, shape index: {}]
  %s2 = inlined_call_operand.vmem [shape: f32[1,128], index: 2, kind: input, shape index: {}]
  %s3 = inlined_call_operand.vmem [shape: f32[128,16], index: 3, kind: input, shape index: {}]
  %s4 = inlined_call_operand.vmem [shape: f32[1,16], index: 4, kind: input, shape index: {}]
  %s5 = inlined_call_operand.hbm [shape: f32[16,16], index: 5, kind: output, shape index: {}]
  %s6 = sld [smem:[#allocation0]]
  $region30: #{tpu_custom_call.1} parent=0
    _
  %s8 = ssub.s32 1, %s6
  %s9 = scalar_select 0, %s8, %s6
  $region1: #{tpu_custom_call.1} parent=0
    #allocation2 [shape = 'u8[8192]{0}', space=vmem, size = 0x2000, scoped, tag = 'output window, operand 0, single buffered']
    #allocation3 [shape = 's32[1]{0}', space=sflag, size = 0x4, scoped, tag = 'scoped memory for tpu_custom_call.1']
    %10 = vsyncpa [#allocation3], 0
    // Predicated region
    $region2: #{tpu_custom_call.1} parent=1 // pred_check
      _
    $region3: #{tpu_custom_call.1} parent=1 // pred_check_branch
      %12 = sbr.rel (0) target = $region5
    $region4: #{tpu_custom_call.1} parent=1 // pred_region
      _
    $region5: #{tpu_custom_call.1} parent=1 // pred_fallthru
      _
    // Predicated region
    $region6: #{tpu_custom_call.1} parent=1 // pred_check
      _
    $region7: #{tpu_custom_call.1} parent=1 // pred_check_branch
      %14 = sbr.rel (0) target = $region9
    $region8: #{tpu_custom_call.1} parent=1 // pred_region
      _
    $region9: #{tpu_custom_call.1} parent=1 // pred_fallthru
      _
    // Predicated region
    $region10: #{tpu_custom_call.1} parent=1 // pred_check
      _
    $region11: #{tpu_custom_call.1} parent=1 // pred_check_branch
      %16 = sbr.rel (0) target = $region13
    $region12: #{tpu_custom_call.1} parent=1 // pred_region
      _
    $region13: #{tpu_custom_call.1} parent=1 // pred_fallthru
      _
    // Predicated region
    $region14: #{tpu_custom_call.1} parent=1 // pred_check
      _
    $region15: #{tpu_custom_call.1} parent=1 // pred_check_branch
      %18 = sbr.rel (0) target = $region17
    $region16: #{tpu_custom_call.1} parent=1 // pred_region
      _
    $region17: #{tpu_custom_call.1} parent=1 // pred_fallthru
      _
    // Predicated region
    $region18: #{tpu_custom_call.1} parent=1 // pred_check
      _
    $region19: #{tpu_custom_call.1} parent=1 // pred_check_branch
      %20 = sbr.rel (0) target = $region21
    $region20: #{tpu_custom_call.1} parent=1 // pred_region
      _
    $region21: #{tpu_custom_call.1} parent=1 // pred_fallthru
      _
    %v21 = vld [vmem:[%s0] sm:$0xff]
    %v22 = vld [vmem:[%s0 + $0x8] sm:$0xff]
    %v23 = vld [vmem:[%s1] sm:$0xff]
    %v24 = vld [vmem:[%s1 + $0x8] sm:$0xff]
    %v25 = vld [vmem:[%s2] sm:$0x1]
    %v27 = vlaneseq
    %v28 = vshrl.u32 %v27, 7
    %v29 = vsub.s32 0, %v28
    %v30 = vrot.slane %v25, %v29
    %vm32 = vcmask 130048
    %v34 = vsel %vm32, %v21, 0
    %v37 = vsel %vm32, %v22, 0
    %39 = vmatprep.subr.mxu0 0.0
    %40 = vmatpush1.msra.mxu0 0.0
    %41 = vmatprep.subr.mxu0 0.0
    %42 = vmatpush1.msra.mxu0 0.0
    %43 = vmatprep.subr.mxu0 0.0
    %44 = vmatpush1.msra.mxu0 0.0
    %45 = vmatprep.subr.mxu0 0.0
    %46 = vmatpush1.msra.mxu0 0.0
    %47 = vmatprep.subr.mxu0 0.0
    %48 = vmatpush1.msra.mxu0 0.0
    %49 = vmatprep.subr.mxu0 0.0
    %50 = vmatpush1.msra.mxu0 0.0
    %51 = vmatprep.subr.mxu0 0.0
    %52 = vmatpush1.msra.mxu0 0.0
    %53 = vmatprep.subr.mxu0 0.0
    %54 = vmatpush1.msra.mxu0 0.0
    %55 = vmatprep.subr.mxu0 0.0
    %56 = vmatpush1.msra.mxu0 0.0
    %57 = vmatprep.subr.mxu0 0.0
    %58 = vmatpush1.msra.mxu0 0.0
    %59 = vmatprep.subr.mxu0 0.0
    %60 = vmatpush1.msra.mxu0 0.0
    %61 = vmatprep.subr.mxu0 0.0
    %62 = vmatpush1.msra.mxu0 0.0
    %63 = vmatprep.subr.mxu0 0.0
    %64 = vmatpush1.msra.mxu0 0.0
    %65 = vmatprep.subr.mxu0 0.0
    %66 = vmatpush1.msra.mxu0 0.0
    %67 = vmatprep.subr.mxu0 0.0
    %68 = vmatpush1.msra.mxu0 %v24
    %69 = vmatprep.subr.mxu0 0.0
    %70 = vmatpush1.msra.mxu0 %v23
    %71 = vmatprep.subr.mxu0 0.0
    %72 = vmatpush2.msra.mxu0 0.0
    %73 = vmatprep.subr.mxu0 0.0
    %74 = vmatpush2.msra.mxu0 0.0
    %75 = vmatprep.subr.mxu0 0.0
    %76 = vmatpush2.msra.mxu0 0.0
    %77 = vmatprep.subr.mxu0 0.0
    %78 = vmatpush2.msra.mxu0 0.0
    %79 = vmatprep.subr.mxu0 0.0
    %80 = vmatpush2.msra.mxu0 0.0
    %81 = vmatprep.subr.mxu0 0.0
    %82 = vmatpush2.msra.mxu0 0.0
    %83 = vmatprep.subr.mxu0 0.0
    %84 = vmatpush2.msra.mxu0 0.0
    %85 = vmatprep.subr.mxu0 0.0
    %86 = vmatpush2.msra.mxu0 0.0
    %87 = vmatprep.subr.mxu0 0.0
    %88 = vmatpush2.msra.mxu0 0.0
    %89 = vmatprep.subr.mxu0 0.0
    %90 = vmatpush2.msra.mxu0 0.0
    %91 = vmatprep.subr.mxu0 0.0
    %92 = vmatpush2.msra.mxu0 0.0
    %93 = vmatprep.subr.mxu0 0.0
    %94 = vmatpush2.msra.mxu0 0.0
    %95 = vmatprep.subr.mxu0 0.0
    %96 = vmatpush2.msra.mxu0 0.0
    %97 = vmatprep.subr.mxu0 0.0
    %98 = vmatpush2.msra.mxu0 0.0
    %99 = vmatprep.subr.mxu0 0.0
    %100 = vmatpush2.msra.mxu0 0.0
    %101 = vmatprep.subr.mxu0 0.0
    %102 = vmatpush2.msra.mxu0 0.0
    %103 = vmatprep.mubr.f32.mxu0 0.0
    %104 = vmatmul.mubr.f32.gmra.mxu0 %v34
    %v105 = vpop.f32.mrf.mxu0
    %v106 = vadd.f32 %v30, %v105
    %v107 = vpop.f32.mrf.mxu0
    %108 = vmatprep.mubr.f32.mxu0 0.0
    %109 = vmatmul.mubr.f32.gmra.mxu0 %v37
    %v110 = vpop.f32.mrf.mxu0
    %v111 = vadd.f32 %v30, %v110
    %v112 = vpop.f32.mrf.mxu0
    %113 = vdwg.mxu0
    %v114 = vmax.f32 %v106, 0.0
    %v115 = vmax.f32 %v111, 0.0
    %v116 = vld [vmem:[%s3] sm:$0xff]
    %v117 = vld [vmem:[%s3 + $0x8] sm:$0xff]
    %v118 = vld [vmem:[%s3 + $0x10] sm:$0xff]
    %v119 = vld [vmem:[%s3 + $0x18] sm:$0xff]
    %v120 = vld [vmem:[%s3 + $0x20] sm:$0xff]
    %v121 = vld [vmem:[%s3 + $0x28] sm:$0xff]
    %v122 = vld [vmem:[%s3 + $0x30] sm:$0xff]
    %v123 = vld [vmem:[%s3 + $0x38] sm:$0xff]
    %v124 = vld [vmem:[%s3 + $0x40] sm:$0xff]
    %v125 = vld [vmem:[%s3 + $0x48] sm:$0xff]
    %v126 = vld [vmem:[%s3 + $0x50] sm:$0xff]
    %v127 = vld [vmem:[%s3 + $0x58] sm:$0xff]
    %v128 = vld [vmem:[%s3 + $0x60] sm:$0xff]
    %v129 = vld [vmem:[%s3 + $0x68] sm:$0xff]
    %v130 = vld [vmem:[%s3 + $0x70] sm:$0xff]
    %v131 = vld [vmem:[%s3 + $0x78] sm:$0xff]
    %v132 = vld [vmem:[%s4] sm:$0x1]
    %v134 = vlaneseq
    %v135 = vshrl.u32 %v134, 7
    %v136 = vsub.s32 0, %v135
    %v137 = vrot.slane %v132, %v136
    %139 = vmatprep.subr.mxu0 0.0
    %140 = vmatpush1.msra.mxu0 %v131
    %141 = vmatprep.subr.mxu0 0.0
    %142 = vmatpush1.msra.mxu0 %v130
    %143 = vmatprep.subr.mxu0 0.0
    %144 = vmatpush1.msra.mxu0 %v129
    %145 = vmatprep.subr.mxu0 0.0
    %146 = vmatpush1.msra.mxu0 %v128
    %147 = vmatprep.subr.mxu0 0.0
    %148 = vmatpush1.msra.mxu0 %v127
    %149 = vmatprep.subr.mxu0 0.0
    %150 = vmatpush1.msra.mxu0 %v126
    %151 = vmatprep.subr.mxu0 0.0
    %152 = vmatpush1.msra.mxu0 %v125
    %153 = vmatprep.subr.mxu0 0.0
    %154 = vmatpush1.msra.mxu0 %v124
    %155 = vmatprep.subr.mxu0 0.0
    %156 = vmatpush1.msra.mxu0 %v123
    %157 = vmatprep.subr.mxu0 0.0
    %158 = vmatpush1.msra.mxu0 %v122
    %159 = vmatprep.subr.mxu0 0.0
    %160 = vmatpush1.msra.mxu0 %v121
    %161 = vmatprep.subr.mxu0 0.0
    %162 = vmatpush1.msra.mxu0 %v120
    %163 = vmatprep.subr.mxu0 0.0
    %164 = vmatpush1.msra.mxu0 %v119
    %165 = vmatprep.subr.mxu0 0.0
    %166 = vmatpush1.msra.mxu0 %v118
    %167 = vmatprep.subr.mxu0 0.0
    %168 = vmatpush1.msra.mxu0 %v117
    %169 = vmatprep.subr.mxu0 0.0
    %170 = vmatpush1.msra.mxu0 %v116
    %171 = vmatprep.subr.mxu0 0.0
    %172 = vmatpush2.msra.mxu0 0.0
    %173 = vmatprep.subr.mxu0 0.0
    %174 = vmatpush2.msra.mxu0 0.0
    %175 = vmatprep.subr.mxu0 0.0
    %176 = vmatpush2.msra.mxu0 0.0
    %177 = vmatprep.subr.mxu0 0.0
    %178 = vmatpush2.msra.mxu0 0.0
    %179 = vmatprep.subr.mxu0 0.0
    %180 = vmatpush2.msra.mxu0 0.0
    %181 = vmatprep.subr.mxu0 0.0
    %182 = vmatpush2.msra.mxu0 0.0
    %183 = vmatprep.subr.mxu0 0.0
    %184 = vmatpush2.msra.mxu0 0.0
    %185 = vmatprep.subr.mxu0 0.0
    %186 = vmatpush2.msra.mxu0 0.0
    %187 = vmatprep.subr.mxu0 0.0
    %188 = vmatpush2.msra.mxu0 0.0
    %189 = vmatprep.subr.mxu0 0.0
    %190 = vmatpush2.msra.mxu0 0.0
    %191 = vmatprep.subr.mxu0 0.0
    %192 = vmatpush2.msra.mxu0 0.0
    %193 = vmatprep.subr.mxu0 0.0
    %194 = vmatpush2.msra.mxu0 0.0
    %195 = vmatprep.subr.mxu0 0.0
    %196 = vmatpush2.msra.mxu0 0.0
    %197 = vmatprep.subr.mxu0 0.0
    %198 = vmatpush2.msra.mxu0 0.0
    %199 = vmatprep.subr.mxu0 0.0
    %200 = vmatpush2.msra.mxu0 0.0
    %201 = vmatprep.subr.mxu0 0.0
    %202 = vmatpush2.msra.mxu0 0.0
    %203 = vmatprep.mubr.f32.mxu0 0.0
    %204 = vmatmul.mubr.f32.gmra.mxu0 %v114
    %v205 = vpop.f32.mrf.mxu0
    %v206 = vadd.f32 %v137, %v205
    %v207 = vpop.f32.mrf.mxu0
    %208 = vmatprep.mubr.f32.mxu0 0.0
    %209 = vmatmul.mubr.f32.gmra.mxu0 %v115
    %v210 = vpop.f32.mrf.mxu0
    %v211 = vadd.f32 %v137, %v210
    %v212 = vpop.f32.mrf.mxu0
    %213 = vdwg.mxu0
    %214 = vst.msk [vmem:[#allocation2] sm:$0xff] %vm32, %v206
    %215 = vst.msk [vmem:[#allocation2 + $0x8] sm:$0xff] %vm32, %v211
    // Predicated region
    $region22: #{tpu_custom_call.1} parent=1 // pred_check
      _
    $region23: #{tpu_custom_call.1} parent=1 // pred_check_branch
      %217 = sbr.rel (0) target = $region25
    $region24: #{tpu_custom_call.1} parent=1 // pred_region
      %s219 = ssub.s32 256, 256
      %220 = vsyncadd [#allocation3], %s219
      %s221 = sshll.u32 [#allocation2], 4
      %s222 = int_to_ptr.vmem [resolvable:$true] %s221
      %227 = dma.vmem_to_hbm [thread:$0]  %s222, 256, %s5, [#allocation3], 128, 128, 8
    $region25: #{tpu_custom_call.1} parent=1 // pred_fallthru
      _
    // Predicated region
    $region26: #{tpu_custom_call.1} parent=1 // pred_check
      _
    $region27: #{tpu_custom_call.1} parent=1 // pred_check_branch
      %229 = sbr.rel (0) target = $region29
    $region28: #{tpu_custom_call.1} parent=1 // pred_region
      %230 = dma.done [#allocation3], 256
    $region29: #{tpu_custom_call.1} parent=1 // pred_fallthru
      _
    %231 = vsyncpa [#allocation3], 1

</llo_original>
